<compile_context>
chip_gen: v7x
topology: tpu7x:2x2x1
jax: 0.10.0
libtpu: 0.0.40
codegen_flags: <defaults>
</compile_context>

<pallas_src>
import functools

import numpy as np

import jax
import jax.numpy as jnp
from jax import lax
from jax.experimental import pallas as pl
from jax.experimental.pallas import tpu as pltpu

EPS = 1e-5
MXU_DT = jnp.bfloat16   # MXU operand dtype; set to jnp.float32 for bit-closer numerics


# --------------------------------------------------------------------------- #
# Kernel
# --------------------------------------------------------------------------- #
def conv_block_kernel(x_ref, w1_ref, w2_ref, g_ref, bt_ref, out_ref, *, H, W, C):
    """Fused (conv3x3 + BN + ReLU) x2 on a lane-dense (N*H, W*C) view.

    x_ref  : (N*H, W*Cin)          f32   NHWC-flattened input rows
    w*_ref : (3*W*Ci, W*Co)        bf16  stacked block-banded weights [ky=-1,0,+1]
    g_ref  : (1, W*Co)             f32   BatchNorm gamma tiled over W
    bt_ref : (1, W*Co)             f32   BatchNorm beta  tiled over W
    out_ref: (N*H, W*Co)           f32
    """
    NH = x_ref.shape[0]
    inv_nhw = 1.0 / float(NH * W)

    # Row-edge masks from an in-kernel iota: implement SAME zero-padding in H and
    # stop the sublane rolls from wrapping across image / batch boundaries.
    h_idx = lax.broadcasted_iota(jnp.int32, (NH, 1), 0) % H
    m_up = (h_idx > 0).astype(jnp.float32)
    m_dn = (h_idx < H - 1).astype(jnp.float32)

    def conv3x3(x2d, w_ref):
        # dy = -1 / +1 taps are sublane rolls (XLU slot) + edge mask; the dx taps
        # and W-direction zero padding live inside the banded weight.  A single
        # stacked operand -> one MXU matmul per conv, one f32->bf16 cast.
        up = pltpu.roll(x2d, shift=1, axis=0) * m_up        # row h-1 (0 at h == 0)
        dn = pltpu.roll(x2d, shift=NH - 1, axis=0) * m_dn   # row h+1 (0 at h == H-1)
        stacked = jnp.concatenate([up, x2d, dn], axis=1).astype(MXU_DT)
        return jnp.dot(stacked, w_ref[...], preferred_element_type=jnp.float32)

    def channel_totals(row):
        # Lane-roll butterfly on a (1, W*C) row: after log2(W) roll+add steps every
        # lane holds its channel's total over all W column groups -- reduction and
        # broadcast in one, no cross-lane reshapes.  (Requires W a power of two.)
        sh = C
        while sh < W * C:
            row = row + pltpu.roll(row, shift=sh, axis=1)
            sh *= 2
        return row

    def bn_relu(y2d):
        # Train-mode BatchNorm2d: biased batch stats over (N, H, W) per channel in
        # a single pass (sum / sum-of-squares), then one fused scale/shift + ReLU.
        s = channel_totals(jnp.sum(y2d, axis=0, keepdims=True))          # (1, W*C)
        ss = channel_totals(jnp.sum(y2d * y2d, axis=0, keepdims=True))   # (1, W*C)
        mean = s * inv_nhw
        var = ss * inv_nhw - mean * mean
        scale = g_ref[...] * lax.rsqrt(var + EPS)    # rsqrt -> EUP slot
        shift = bt_ref[...] - scale * mean
        return jnp.maximum(y2d * scale + shift, 0.0)

    h1 = bn_relu(conv3x3(x_ref[...], w1_ref))
    out_ref[...] = bn_relu(conv3x3(h1, w2_ref))


# --------------------------------------------------------------------------- #
# One-time (load-time) parameter preprocessing — kept out of the hot path
# --------------------------------------------------------------------------- #
def _banded_weight(w_hwio, W):
    """Fold the kx taps + W-direction zero padding of a 3x3 SAME conv into a
    block-banded matrix, and stack the three ky taps along K:
    result shape (3*W*Cin, W*Cout), row blocks ordered [ky=-1, ky=0, ky=+1]
    to match the in-kernel [up | x | dn] operand stacking."""
    w = np.asarray(w_hwio, np.float32)            # (3, 3, Ci, Co)
    _, kw, Ci, Co = w.shape
    B = np.zeros((3, W * Ci, W * Co), np.float32)
    for ky in range(3):
        for wo in range(W):
            for kx in range(kw):
                wi = wo + kx - 1                  # input column (SAME padding)
                if 0 <= wi < W:
                    B[ky, wi * Ci:(wi + 1) * Ci, wo * Co:(wo + 1) * Co] = w[ky, kx]
    return jnp.asarray(B.reshape(3 * W * Ci, W * Co), MXU_DT)


def fold_params(params, W):
    """Precompute stacked banded weights and W-tiled gamma/beta.  The conv biases
    are dropped on purpose: a per-channel bias immediately before a train-mode
    BatchNorm cancels exactly.  A real PyTorch checkpoint (OIHW) would also be
    transposed to HWIO here."""
    w1, _b1, w2, _b2, gamma, beta = params
    Cout = w1.shape[-1]
    return (_banded_weight(w1, W),
            _banded_weight(w2, W),
            jnp.tile(gamma.astype(jnp.float32), W).reshape(1, W * Cout),
            jnp.tile(beta.astype(jnp.float32), W).reshape(1, W * Cout))


# --------------------------------------------------------------------------- #
# Wrapper: NCHW in / NCHW out (module interface); kernel runs on (N*H, W*C)
# --------------------------------------------------------------------------- #
def conv_block(x_nchw, folded):
    w1s, w2s, g, bt = folded
    N, Cin, H, W = x_nchw.shape
    Cout = g.shape[1] // W
    assert W > 0 and (W & (W - 1)) == 0, "lane butterfly needs W to be a power of 2"

    x2d = (jnp.transpose(x_nchw, (0, 2, 3, 1))     # NHWC (PyTorch API is NCHW)
           .astype(jnp.float32)
           .reshape(N * H, W * Cin))

    vm = pl.BlockSpec(memory_space=pltpu.MemorySpace.VMEM)
    out2d = pl.pallas_call(
        functools.partial(conv_block_kernel, H=H, W=W, C=Cout),
        out_shape=jax.ShapeDtypeStruct((N * H, W * Cout), jnp.float32),
        in_specs=[vm] * 5,
        out_specs=vm,
    )(x2d, w1s, w2s, g, bt)

    return jnp.transpose(out2d.reshape(N, H, W, Cout), (0, 3, 1, 2))


# --------------------------------------------------------------------------- #
# Pure-JAX reference (f32, HIGHEST precision) — includes the conv biases
# --------------------------------------------------------------------------- #
def conv_block_ref(x_nchw, params):
    w1, b1, w2, b2, gamma, beta = params
    x = jnp.transpose(x_nchw, (0, 2, 3, 1)).astype(jnp.float32)

    def conv(h, w, b):
        y = lax.conv_general_dilated(
            h, w, window_strides=(1, 1), padding='SAME',
            dimension_numbers=('NHWC', 'HWIO', 'NHWC'),
            precision=lax.Precision.HIGHEST)
        return y + b

    def bn_relu(y):
        m = jnp.mean(y, axis=(0, 1, 2), keepdims=True)
        v = jnp.mean((y - m) ** 2, axis=(0, 1, 2), keepdims=True)
        return jnp.maximum(gamma * (y - m) * lax.rsqrt(v + EPS) + beta, 0.0)

    h = bn_relu(conv(x, w1, b1))
    h = bn_relu(conv(h, w2, b2))
    return jnp.transpose(h, (0, 3, 1, 2))


if __name__ == "__main__":
    key = jax.random.PRNGKey(0)
    k0, k1, k2, k3, k4, k5, kx = jax.random.split(key, 7)

    N, Cin, Cout, H, W = 2, 4, 8, 16, 16

    # Deterministic synthetic parameters (HWIO layout for the kernel).
    w1 = 0.1 * jax.random.normal(k0, (3, 3, Cin, Cout), jnp.float32)
    b1 = 0.1 * jax.random.normal(k1, (Cout,), jnp.float32)
    w2 = 0.1 * jax.random.normal(k2, (3, 3, Cout, Cout), jnp.float32)
    b2 = 0.1 * jax.random.normal(k3, (Cout,), jnp.float32)
    gamma = 1.0 + 0.1 * jax.random.normal(k4, (Cout,), jnp.float32)
    beta = 0.1 * jax.random.normal(k5, (Cout,), jnp.float32)
    params = (w1, b1, w2, b2, gamma, beta)

    x = jax.random.normal(kx, (N, Cin, H, W), jnp.float32)   # NCHW input

    folded = fold_params(params, W)                          # load-time prep
    out = jax.block_until_ready(conv_block(x, folded))
    ref = jax.block_until_ready(conv_block_ref(x, params))

    assert out.shape == (N, Cout, H, W), out.shape
    assert bool(jnp.all(jnp.isfinite(out)))
    # Tolerance reflects bf16 MXU operands (errors compound over two conv+BN
    # stages) vs the f32 Precision.HIGHEST reference; the reference keeps the
    # conv biases, so this also verifies the bias-cancellation identity.
    # Set MXU_DT = jnp.float32 above to recover <1e-3 agreement.
    assert bool(jnp.allclose(out, ref, atol=5e-2, rtol=5e-2)), float(
        jnp.max(jnp.abs(out - ref)))

    print("KERNEL_OK")
</pallas_src>

<mosaic_0001>
module attributes {stable_mosaic.version = 11 : i64} {
  func.func @conv_block_kernel(%arg0: memref<32x64xf32, #tpu.memory_space<vmem>>, %arg1: memref<192x128xbf16, #tpu.memory_space<vmem>>, %arg2: memref<384x128xbf16, #tpu.memory_space<vmem>>, %arg3: memref<1x128xf32, #tpu.memory_space<vmem>>, %arg4: memref<1x128xf32, #tpu.memory_space<vmem>>, %arg5: memref<32x128xf32, #tpu.memory_space<vmem>>) attributes {dimension_semantics = [], scalar_prefetch = 0 : i64, scratch_operands = 0 : i64, tpu.core_type = #tpu.core_type<tc>} {
    %0 = tpu.iota {dimensions = array<i32: 0>} : vector<32x1xi32>
    %c16_i32 = arith.constant 16 : i32
    %c0_i32 = arith.constant 0 : i32
    %1 = arith.cmpi eq, %c16_i32, %c0_i32 : i32
    %c1_i32 = arith.constant 1 : i32
    %2 = arith.select %1, %c1_i32, %c16_i32 : i32
    %3 = vector.broadcast %2 : i32 to vector<32x1xi32>
    %4 = arith.remsi %0, %3 : vector<32x1xi32>
    %c0_i32_0 = arith.constant 0 : i32
    %5 = vector.broadcast %c0_i32_0 : i32 to vector<32x1xi32>
    %6 = arith.cmpi ne, %4, %5 : vector<32x1xi32>
    %c0_i32_1 = arith.constant 0 : i32
    %7 = vector.broadcast %c0_i32_1 : i32 to vector<32x1xi32>
    %8 = arith.cmpi slt, %4, %7 : vector<32x1xi32>
    %c0_i32_2 = arith.constant 0 : i32
    %9 = arith.cmpi slt, %2, %c0_i32_2 : i32
    %10 = vector.broadcast %9 : i1 to vector<32x1xi1>
    %11 = vector.broadcast %10 : vector<32x1xi1> to vector<32x1xi1>
    %12 = arith.xori %8, %11 : vector<32x1xi1>
    %13 = arith.andi %12, %6 : vector<32x1xi1>
    %14 = vector.broadcast %2 : i32 to vector<32x1xi32>
    %15 = arith.addi %4, %14 : vector<32x1xi32>
    %16 = arith.select %13, %15, %4 : vector<32x1xi1>, vector<32x1xi32>
    %c0_i32_3 = arith.constant 0 : i32
    %17 = vector.broadcast %c0_i32_3 : i32 to vector<32x1xi32>
    %18 = arith.cmpi sgt, %16, %17 : vector<32x1xi32>
    %19 = arith.extui %18 : vector<32x1xi1> to vector<32x1xi32>
    %20 = arith.sitofp %19 : vector<32x1xi32> to vector<32x1xf32>
    %c15_i32 = arith.constant 15 : i32
    %21 = vector.broadcast %c15_i32 : i32 to vector<32x1xi32>
    %22 = arith.cmpi slt, %16, %21 : vector<32x1xi32>
    %23 = arith.extui %22 : vector<32x1xi1> to vector<32x1xi32>
    %24 = arith.sitofp %23 : vector<32x1xi32> to vector<32x1xf32>
    %c0 = arith.constant 0 : index
    %c0_4 = arith.constant 0 : index
    %25 = vector.load %arg0[%c0, %c0_4] : memref<32x64xf32, #tpu.memory_space<vmem>>, vector<32x64xf32>
    %c1_i32_5 = arith.constant 1 : i32
    %26 = tpu.dynamic_rotate %25 by %c1_i32_5 dim 0 : vector<32x64xf32>, i32 -> vector<32x64xf32>
    %27 = vector.broadcast %20 : vector<32x1xf32> to vector<32x64xf32>
    %28 = arith.mulf %26, %27 : vector<32x64xf32>
    %c31_i32 = arith.constant 31 : i32
    %29 = tpu.dynamic_rotate %25 by %c31_i32 dim 0 : vector<32x64xf32>, i32 -> vector<32x64xf32>
    %30 = vector.broadcast %24 : vector<32x1xf32> to vector<32x64xf32>
    %31 = arith.mulf %29, %30 : vector<32x64xf32>
    %32 = tpu.concatenate %28, %25, %31 in 1 : vector<32x64xf32>, vector<32x64xf32>, vector<32x64xf32> -> vector<32x192xf32>
    %33 = arith.truncf %32 : vector<32x192xf32> to vector<32x192xbf16>
    %c0_6 = arith.constant 0 : index
    %c0_7 = arith.constant 0 : index
    %34 = vector.load %arg1[%c0_6, %c0_7] : memref<192x128xbf16, #tpu.memory_space<vmem>>, vector<192x128xbf16>
    %cst = arith.constant dense<0.000000e+00> : vector<32x128xf32>
    %35 = tpu.matmul %33, %34, %cst {dimension_numbers = #tpu.dot_dimension_numbers<[1], [0], [0], [1], [0, 0, 1, 1], [], []>} : vector<32x192xbf16>, vector<192x128xbf16>, vector<32x128xf32> -> vector<32x128xf32>
    %cst_8 = arith.constant dense<0.000000e+00> : vector<128xf32>
    %36 = vector.multi_reduction <add>, %35, %cst_8 [0] : vector<32x128xf32> to vector<128xf32>
    %37 = vector.shape_cast %36 : vector<128xf32> to vector<1x128xf32>
    %c8_i32 = arith.constant 8 : i32
    %38 = tpu.dynamic_rotate %37 by %c8_i32 dim 1 : vector<1x128xf32>, i32 -> vector<1x128xf32>
    %39 = arith.addf %37, %38 : vector<1x128xf32>
    %c16_i32_9 = arith.constant 16 : i32
    %40 = tpu.dynamic_rotate %39 by %c16_i32_9 dim 1 : vector<1x128xf32>, i32 -> vector<1x128xf32>
    %41 = arith.addf %39, %40 : vector<1x128xf32>
    %c32_i32 = arith.constant 32 : i32
    %42 = tpu.dynamic_rotate %41 by %c32_i32 dim 1 : vector<1x128xf32>, i32 -> vector<1x128xf32>
    %43 = arith.addf %41, %42 : vector<1x128xf32>
    %c64_i32 = arith.constant 64 : i32
    %44 = tpu.dynamic_rotate %43 by %c64_i32 dim 1 : vector<1x128xf32>, i32 -> vector<1x128xf32>
    %45 = arith.addf %43, %44 : vector<1x128xf32>
    %46 = arith.mulf %35, %35 : vector<32x128xf32>
    %cst_10 = arith.constant dense<0.000000e+00> : vector<128xf32>
    %47 = vector.multi_reduction <add>, %46, %cst_10 [0] : vector<32x128xf32> to vector<128xf32>
    %48 = vector.shape_cast %47 : vector<128xf32> to vector<1x128xf32>
    %c8_i32_11 = arith.constant 8 : i32
    %49 = tpu.dynamic_rotate %48 by %c8_i32_11 dim 1 : vector<1x128xf32>, i32 -> vector<1x128xf32>
    %50 = arith.addf %48, %49 : vector<1x128xf32>
    %c16_i32_12 = arith.constant 16 : i32
    %51 = tpu.dynamic_rotate %50 by %c16_i32_12 dim 1 : vector<1x128xf32>, i32 -> vector<1x128xf32>
    %52 = arith.addf %50, %51 : vector<1x128xf32>
    %c32_i32_13 = arith.constant 32 : i32
    %53 = tpu.dynamic_rotate %52 by %c32_i32_13 dim 1 : vector<1x128xf32>, i32 -> vector<1x128xf32>
    %54 = arith.addf %52, %53 : vector<1x128xf32>
    %c64_i32_14 = arith.constant 64 : i32
    %55 = tpu.dynamic_rotate %54 by %c64_i32_14 dim 1 : vector<1x128xf32>, i32 -> vector<1x128xf32>
    %56 = arith.addf %54, %55 : vector<1x128xf32>
    %cst_15 = arith.constant 0.001953125 : f32
    %57 = vector.broadcast %cst_15 : f32 to vector<1x128xf32>
    %58 = arith.mulf %45, %57 : vector<1x128xf32>
    %cst_16 = arith.constant 0.001953125 : f32
    %59 = vector.broadcast %cst_16 : f32 to vector<1x128xf32>
    %60 = arith.mulf %56, %59 : vector<1x128xf32>
    %61 = arith.mulf %58, %58 : vector<1x128xf32>
    %62 = arith.subf %60, %61 : vector<1x128xf32>
    %c0_17 = arith.constant 0 : index
    %c0_18 = arith.constant 0 : index
    %63 = vector.load %arg3[%c0_17, %c0_18] : memref<1x128xf32, #tpu.memory_space<vmem>>, vector<1x128xf32>
    %cst_19 = arith.constant 9.99999974E-6 : f32
    %64 = vector.broadcast %cst_19 : f32 to vector<1x128xf32>
    %65 = arith.addf %62, %64 : vector<1x128xf32>
    %66 = math.rsqrt %65 : vector<1x128xf32>
    %67 = arith.mulf %63, %66 : vector<1x128xf32>
    %c0_20 = arith.constant 0 : index
    %c0_21 = arith.constant 0 : index
    %68 = vector.load %arg4[%c0_20, %c0_21] : memref<1x128xf32, #tpu.memory_space<vmem>>, vector<1x128xf32>
    %69 = arith.mulf %67, %58 : vector<1x128xf32>
    %70 = arith.subf %68, %69 : vector<1x128xf32>
    %71 = vector.broadcast %67 : vector<1x128xf32> to vector<32x128xf32>
    %72 = arith.mulf %35, %71 : vector<32x128xf32>
    %73 = vector.broadcast %70 : vector<1x128xf32> to vector<32x128xf32>
    %74 = arith.addf %72, %73 : vector<32x128xf32>
    %cst_22 = arith.constant 0.000000e+00 : f32
    %75 = vector.broadcast %cst_22 : f32 to vector<32x128xf32>
    %76 = arith.maximumf %74, %75 : vector<32x128xf32>
    %c1_i32_23 = arith.constant 1 : i32
    %77 = tpu.dynamic_rotate %76 by %c1_i32_23 dim 0 : vector<32x128xf32>, i32 -> vector<32x128xf32>
    %78 = vector.broadcast %20 : vector<32x1xf32> to vector<32x128xf32>
    %79 = arith.mulf %77, %78 : vector<32x128xf32>
    %c31_i32_24 = arith.constant 31 : i32
    %80 = tpu.dynamic_rotate %76 by %c31_i32_24 dim 0 : vector<32x128xf32>, i32 -> vector<32x128xf32>
    %81 = vector.broadcast %24 : vector<32x1xf32> to vector<32x128xf32>
    %82 = arith.mulf %80, %81 : vector<32x128xf32>
    %83 = tpu.concatenate %79, %76, %82 in 1 : vector<32x128xf32>, vector<32x128xf32>, vector<32x128xf32> -> vector<32x384xf32>
    %84 = arith.truncf %83 : vector<32x384xf32> to vector<32x384xbf16>
    %c0_25 = arith.constant 0 : index
    %c0_26 = arith.constant 0 : index
    %85 = vector.load %arg2[%c0_25, %c0_26] : memref<384x128xbf16, #tpu.memory_space<vmem>>, vector<384x128xbf16>
    %cst_27 = arith.constant dense<0.000000e+00> : vector<32x128xf32>
    %86 = tpu.matmul %84, %85, %cst_27 {dimension_numbers = #tpu.dot_dimension_numbers<[1], [0], [0], [1], [0, 0, 1, 1], [], []>} : vector<32x384xbf16>, vector<384x128xbf16>, vector<32x128xf32> -> vector<32x128xf32>
    %cst_28 = arith.constant dense<0.000000e+00> : vector<128xf32>
    %87 = vector.multi_reduction <add>, %86, %cst_28 [0] : vector<32x128xf32> to vector<128xf32>
    %88 = vector.shape_cast %87 : vector<128xf32> to vector<1x128xf32>
    %c8_i32_29 = arith.constant 8 : i32
    %89 = tpu.dynamic_rotate %88 by %c8_i32_29 dim 1 : vector<1x128xf32>, i32 -> vector<1x128xf32>
    %90 = arith.addf %88, %89 : vector<1x128xf32>
    %c16_i32_30 = arith.constant 16 : i32
    %91 = tpu.dynamic_rotate %90 by %c16_i32_30 dim 1 : vector<1x128xf32>, i32 -> vector<1x128xf32>
    %92 = arith.addf %90, %91 : vector<1x128xf32>
    %c32_i32_31 = arith.constant 32 : i32
    %93 = tpu.dynamic_rotate %92 by %c32_i32_31 dim 1 : vector<1x128xf32>, i32 -> vector<1x128xf32>
    %94 = arith.addf %92, %93 : vector<1x128xf32>
    %c64_i32_32 = arith.constant 64 : i32
    %95 = tpu.dynamic_rotate %94 by %c64_i32_32 dim 1 : vector<1x128xf32>, i32 -> vector<1x128xf32>
    %96 = arith.addf %94, %95 : vector<1x128xf32>
    %97 = arith.mulf %86, %86 : vector<32x128xf32>
    %cst_33 = arith.constant dense<0.000000e+00> : vector<128xf32>
    %98 = vector.multi_reduction <add>, %97, %cst_33 [0] : vector<32x128xf32> to vector<128xf32>
    %99 = vector.shape_cast %98 : vector<128xf32> to vector<1x128xf32>
    %c8_i32_34 = arith.constant 8 : i32
    %100 = tpu.dynamic_rotate %99 by %c8_i32_34 dim 1 : vector<1x128xf32>, i32 -> vector<1x128xf32>
    %101 = arith.addf %99, %100 : vector<1x128xf32>
    %c16_i32_35 = arith.constant 16 : i32
    %102 = tpu.dynamic_rotate %101 by %c16_i32_35 dim 1 : vector<1x128xf32>, i32 -> vector<1x128xf32>
    %103 = arith.addf %101, %102 : vector<1x128xf32>
    %c32_i32_36 = arith.constant 32 : i32
    %104 = tpu.dynamic_rotate %103 by %c32_i32_36 dim 1 : vector<1x128xf32>, i32 -> vector<1x128xf32>
    %105 = arith.addf %103, %104 : vector<1x128xf32>
    %c64_i32_37 = arith.constant 64 : i32
    %106 = tpu.dynamic_rotate %105 by %c64_i32_37 dim 1 : vector<1x128xf32>, i32 -> vector<1x128xf32>
    %107 = arith.addf %105, %106 : vector<1x128xf32>
    %cst_38 = arith.constant 0.001953125 : f32
    %108 = vector.broadcast %cst_38 : f32 to vector<1x128xf32>
    %109 = arith.mulf %96, %108 : vector<1x128xf32>
    %cst_39 = arith.constant 0.001953125 : f32
    %110 = vector.broadcast %cst_39 : f32 to vector<1x128xf32>
    %111 = arith.mulf %107, %110 : vector<1x128xf32>
    %112 = arith.mulf %109, %109 : vector<1x128xf32>
    %113 = arith.subf %111, %112 : vector<1x128xf32>
    %c0_40 = arith.constant 0 : index
    %c0_41 = arith.constant 0 : index
    %114 = vector.load %arg3[%c0_40, %c0_41] : memref<1x128xf32, #tpu.memory_space<vmem>>, vector<1x128xf32>
    %cst_42 = arith.constant 9.99999974E-6 : f32
    %115 = vector.broadcast %cst_42 : f32 to vector<1x128xf32>
    %116 = arith.addf %113, %115 : vector<1x128xf32>
    %117 = math.rsqrt %116 : vector<1x128xf32>
    %118 = arith.mulf %114, %117 : vector<1x128xf32>
    %c0_43 = arith.constant 0 : index
    %c0_44 = arith.constant 0 : index
    %119 = vector.load %arg4[%c0_43, %c0_44] : memref<1x128xf32, #tpu.memory_space<vmem>>, vector<1x128xf32>
    %120 = arith.mulf %118, %109 : vector<1x128xf32>
    %121 = arith.subf %119, %120 : vector<1x128xf32>
    %122 = vector.broadcast %118 : vector<1x128xf32> to vector<32x128xf32>
    %123 = arith.mulf %86, %122 : vector<32x128xf32>
    %124 = vector.broadcast %121 : vector<1x128xf32> to vector<32x128xf32>
    %125 = arith.addf %123, %124 : vector<32x128xf32>
    %cst_45 = arith.constant 0.000000e+00 : f32
    %126 = vector.broadcast %cst_45 : f32 to vector<32x128xf32>
    %127 = arith.maximumf %125, %126 : vector<32x128xf32>
    %c0_46 = arith.constant 0 : index
    %c0_47 = arith.constant 0 : index
    %128 = vector.load %arg5[%c0_46, %c0_47] : memref<32x128xf32, #tpu.memory_space<vmem>>, vector<32x128xf32>
    tpu.vector_store %arg5[%c0_46, %c0_47], %127 {strides = array<i32>} : memref<32x128xf32, #tpu.memory_space<vmem>>, vector<32x128xf32>,
    return
  }
}

</mosaic_0001>

<llo_original>
// kernel: tpu_custom_call.1
$region0: #{tpu_custom_call.1}
  #allocation0 [shape = 'u32[]', space=smem, size = 0x4, offset = 0x4, fixed_abs, tag = 'smem constant byte address 0x4 - core index']
  #allocation1 [shape = 'u32[144,128]{1,0:T(1,128)}', space=vmem, size = 0x12000, scoped, tag = 'internal scratch']
  %s0 = inlined_call_operand.hbm [shape: f32[32,64], index: 0, kind: input, shape index: {}]
  %s1 = inlined_call_operand.hbm [shape: bf16[192,128], index: 1, kind: input, shape index: {}]
  %s2 = inlined_call_operand.hbm [shape: bf16[384,128], index: 2, kind: input, shape index: {}]
  %s3 = inlined_call_operand.vmem [shape: f32[1,128], index: 3, kind: input, shape index: {}]
  %s4 = inlined_call_operand.vmem [shape: f32[1,128], index: 4, kind: input, shape index: {}]
  %s5 = inlined_call_operand.hbm [shape: f32[32,128], index: 5, kind: output, shape index: {}]
  %s6 = sld [smem:[#allocation0]]
  $region42: #{tpu_custom_call.1} parent=0
    _
  %s8 = ssub.s32 1, %s6
  %s9 = scalar_select 0, %s8, %s6
  $region1: #{tpu_custom_call.1} parent=0
    #allocation2 [shape = 'u8[16384]{0}', space=vmem, size = 0x4000, scoped, tag = 'input window, operand 0, single buffered']
    #allocation3 [shape = 's32[1]{0}', space=sflag, size = 0x4, scoped, tag = 'scoped memory for tpu_custom_call.1']
    #allocation4 [shape = 's32[1]{0}', space=sflag, size = 0x4, scoped, tag = 'scoped memory for tpu_custom_call.1']
    #allocation5 [shape = 'u8[49152]{0}', space=vmem, size = 0xc000, scoped, tag = 'input window, operand 1, single buffered']
    #allocation6 [shape = 's32[1]{0}', space=sflag, size = 0x4, scoped, tag = 'scoped memory for tpu_custom_call.1']
    #allocation7 [shape = 'u8[98304]{0}', space=vmem, size = 0x18000, scoped, tag = 'input window, operand 2, single buffered']
    #allocation8 [shape = 'u8[16384]{0}', space=vmem, size = 0x4000, scoped, tag = 'output window, operand 0, single buffered']
    %10 = vsyncpa [#allocation3], 0
    %11 = vsyncpa [#allocation6], 0
    %12 = vsyncpa [#allocation4], 0
    // Predicated region
    $region2: #{tpu_custom_call.1} parent=1 // pred_check
      _
    $region3: #{tpu_custom_call.1} parent=1 // pred_check_branch
      %14 = sbr.rel (0) target = $region5
    $region4: #{tpu_custom_call.1} parent=1 // pred_region
      %s16 = ssub.s32 512, 512
      %17 = vsyncadd [#allocation3], %s16
      %s18 = sshll.u32 [#allocation2], 4
      %s19 = int_to_ptr.vmem [resolvable:$true] %s18
      %24 = dma.hbm_to_vmem [thread:$0]  %s0, 512, %s19, [#allocation3], 128, 128, 8
    $region5: #{tpu_custom_call.1} parent=1 // pred_fallthru
      _
    // Predicated region
    $region6: #{tpu_custom_call.1} parent=1 // pred_check
      _
    $region7: #{tpu_custom_call.1} parent=1 // pred_check_branch
      %26 = sbr.rel (0) target = $region9
    $region8: #{tpu_custom_call.1} parent=1 // pred_region
      %s28 = ssub.s32 1536, 1536
      %29 = vsyncadd [#allocation6], %s28
      %s30 = sshll.u32 [#allocation5], 4
      %s31 = int_to_ptr.vmem [resolvable:$true] %s30
      %36 = dma.hbm_to_vmem [thread:$0]  %s1, 1536, %s31, [#allocation6], 64, 64, 4
    $region9: #{tpu_custom_call.1} parent=1 // pred_fallthru
      _
    // Predicated region
    $region10: #{tpu_custom_call.1} parent=1 // pred_check
      _
    $region11: #{tpu_custom_call.1} parent=1 // pred_check_branch
      %38 = sbr.rel (0) target = $region13
    $region12: #{tpu_custom_call.1} parent=1 // pred_region
      %s40 = ssub.s32 3072, 3072
      %41 = vsyncadd [#allocation6], %s40
      %s42 = sshll.u32 [#allocation7], 4
      %s43 = int_to_ptr.vmem [resolvable:$true] %s42
      %48 = dma.hbm_to_vmem [thread:$0]  %s2, 3072, %s43, [#allocation6], 64, 64, 4
    $region13: #{tpu_custom_call.1} parent=1 // pred_fallthru
      _
    // Predicated region
    $region14: #{tpu_custom_call.1} parent=1 // pred_check
      _
    $region15: #{tpu_custom_call.1} parent=1 // pred_check_branch
      %50 = sbr.rel (0) target = $region17
    $region16: #{tpu_custom_call.1} parent=1 // pred_region
      _
    $region17: #{tpu_custom_call.1} parent=1 // pred_fallthru
      _
    // Predicated region
    $region18: #{tpu_custom_call.1} parent=1 // pred_check
      _
    $region19: #{tpu_custom_call.1} parent=1 // pred_check_branch
      %52 = sbr.rel (0) target = $region21
    $region20: #{tpu_custom_call.1} parent=1 // pred_region
      _
    $region21: #{tpu_custom_call.1} parent=1 // pred_fallthru
      _
    // Predicated region
    $region22: #{tpu_custom_call.1} parent=1 // pred_check
      _
    $region23: #{tpu_custom_call.1} parent=1 // pred_check_branch
      %54 = sbr.rel (0) target = $region25
    $region24: #{tpu_custom_call.1} parent=1 // pred_region
      %55 = dma.done [#allocation3], 512
    $region25: #{tpu_custom_call.1} parent=1 // pred_fallthru
      _
    // Predicated region
    $region26: #{tpu_custom_call.1} parent=1 // pred_check
      _
    $region27: #{tpu_custom_call.1} parent=1 // pred_check_branch
      %57 = sbr.rel (0) target = $region29
    $region28: #{tpu_custom_call.1} parent=1 // pred_region
      %58 = dma.done [#allocation6], 1536
    $region29: #{tpu_custom_call.1} parent=1 // pred_fallthru
      _
    // Predicated region
    $region30: #{tpu_custom_call.1} parent=1 // pred_check
      _
    $region31: #{tpu_custom_call.1} parent=1 // pred_check_branch
      %60 = sbr.rel (0) target = $region33
    $region32: #{tpu_custom_call.1} parent=1 // pred_region
      %61 = dma.done [#allocation6], 3072
    $region33: #{tpu_custom_call.1} parent=1 // pred_fallthru
      _
    %v63 = vlaneseq
    %v64 = vshrl.u32 %v63, 7
    %v65 = vadd.s32 %v64, 8
    %v66 = vadd.s32 %v64, 16
    %v67 = vadd.s32 %v64, 24
    %vm68 = vcmp.lt.s32.totalorder %v64, 0
    %v69 = vsub.s32 0, %v64
    %v70 = vsel %vm68, %v69, %v64
    %v71 = vshrl.u32 %v70, 4
    %v72 = vand.u32 %v70, 15
    %v73 = vsub.s32 0, %v72
    %v74 = vsel %vm68, %v73, %v72
    %vm75 = vcmp.lt.s32.totalorder %v65, 0
    %v76 = vsub.s32 0, %v65
    %v77 = vsel %vm75, %v76, %v65
    %v78 = vshrl.u32 %v77, 4
    %v79 = vand.u32 %v77, 15
    %v80 = vsub.s32 0, %v79
    %v81 = vsel %vm75, %v80, %v79
    %vm82 = vcmp.lt.s32.totalorder %v66, 0
    %v83 = vsub.s32 0, %v66
    %v84 = vsel %vm82, %v83, %v66
    %v85 = vshrl.u32 %v84, 4
    %v86 = vand.u32 %v84, 15
    %v87 = vsub.s32 0, %v86
    %v88 = vsel %vm82, %v87, %v86
    %vm89 = vcmp.lt.s32.totalorder %v67, 0
    %v90 = vsub.s32 0, %v67
    %v91 = vsel %vm89, %v90, %v67
    %v92 = vshrl.u32 %v91, 4
    %v93 = vand.u32 %v91, 15
    %v94 = vsub.s32 0, %v93
    %v95 = vsel %vm89, %v94, %v93
    %vm96 = vcmp.ne.s32.totalorder %v74, 0
    %vm97 = vcmp.ne.s32.totalorder %v81, 0
    %vm98 = vcmp.ne.s32.totalorder %v88, 0
    %vm99 = vcmp.ne.s32.totalorder %v95, 0
    %vm100 = vcmp.lt.s32.totalorder %v74, 0
    %vm101 = vcmp.lt.s32.totalorder %v81, 0
    %vm102 = vcmp.lt.s32.totalorder %v88, 0
    %vm103 = vcmp.lt.s32.totalorder %v95, 0
    %vm104 = vmand %vm100, %vm96
    %vm105 = vmand %vm101, %vm97
    %vm106 = vmand %vm102, %vm98
    %vm107 = vmand %vm103, %vm99
    %v108 = vadd.s32 %v74, 16
    %v109 = vadd.s32 %v81, 16
    %v110 = vadd.s32 %v88, 16
    %v111 = vadd.s32 %v95, 16
    %v112 = vsel %vm104, %v108, %v74
    %v113 = vsel %vm105, %v109, %v81
    %v114 = vsel %vm106, %v110, %v88
    %v115 = vsel %vm107, %v111, %v95
    %vm116 = vcmp.gt.s32.totalorder %v112, 0
    %vm117 = vcmp.gt.s32.totalorder %v113, 0
    %vm118 = vcmp.gt.s32.totalorder %v114, 0
    %vm119 = vcmp.gt.s32.totalorder %v115, 0
    %v120 = vsel %vm116, 1, 0
    %v121 = vsel %vm117, 1, 0
    %v122 = vsel %vm118, 1, 0
    %v123 = vsel %vm119, 1, 0
    %v124 = vcvt.s32.f32 %v120
    %v125 = vcvt.s32.f32 %v121
    %v126 = vcvt.s32.f32 %v122
    %v127 = vcvt.s32.f32 %v123
    %vm128 = vcmp.lt.s32.totalorder %v112, 15
    %vm129 = vcmp.lt.s32.totalorder %v113, 15
    %vm130 = vcmp.lt.s32.totalorder %v114, 15
    %vm131 = vcmp.lt.s32.totalorder %v115, 15
    %v132 = vsel %vm128, 1, 0
    %v133 = vsel %vm129, 1, 0
    %v134 = vsel %vm130, 1, 0
    %v135 = vsel %vm131, 1, 0
    %v136 = vcvt.s32.f32 %v132
    %v137 = vcvt.s32.f32 %v133
    %v138 = vcvt.s32.f32 %v134
    %v139 = vcvt.s32.f32 %v135
    %v140 = vld [vmem:[#allocation2] sm:$0xff]
    %v141 = vld [vmem:[#allocation2 + $0x8] sm:$0xff]
    %v142 = vld [vmem:[#allocation2 + $0x10] sm:$0xff]
    %v143 = vld [vmem:[#allocation2 + $0x18] sm:$0xff]
    %v144 = vrot.slane %v140, 7
    %v145 = vrot.slane %v141, 7
    %v146 = vrot.slane %v142, 7
    %v147 = vrot.slane %v143, 7
    %vm148 = vcmp.lt.s32.totalorder %v64, 1
    %v149 = vsel %vm148, %v146, %v147
    %v150 = vsel %vm148, %v145, %v146
    %v151 = vsel %vm148, %v144, %v145
    %v152 = vsel %vm148, %v147, %v144
    %v153 = vmul.f32 %v152, %v124
    %v154 = vmul.f32 %v151, %v125
    %v155 = vmul.f32 %v150, %v126
    %v156 = vmul.f32 %v149, %v127
    %v157 = vrot.slane %v140, 1
    %v158 = vrot.slane %v141, 1
    %v159 = vrot.slane %v142, 1
    %v160 = vrot.slane %v143, 1
    %vm161 = vcmp.lt.s32.totalorder %v64, 7
    %v162 = vsel %vm161, %v159, %v160
    %v163 = vsel %vm161, %v158, %v159
    %v164 = vsel %vm161, %v157, %v158
    %v165 = vsel %vm161, %v160, %v157
    %v166 = vmul.f32 %v164, %v136
    %v167 = vmul.f32 %v163, %v137
    %v168 = vmul.f32 %v162, %v138
    %v169 = vmul.f32 %v165, %v139
    %174 = vrot.lane.b32.xlu0 %v140, 64
    %v175 = vpop.permute.xlu0 %174
    %176 = vrot.lane.b32.xlu0 %v141, 64
    %v177 = vpop.permute.xlu0 %176
    %178 = vrot.lane.b32.xlu0 %v142, 64
    %v179 = vpop.permute.xlu0 %178
    %180 = vrot.lane.b32.xlu0 %v143, 64
    %v181 = vpop.permute.xlu0 %180
    %vm186 = vcmask 523264
    %v187 = vsel %vm186, %v153, %v175
    %v188 = vsel %vm186, %v154, %v177
    %v189 = vsel %vm186, %v155, %v179
    %v190 = vsel %vm186, %v156, %v181
    %v191 = vpack.c.bf16 %v188, %v187
    %v192 = vpack.c.bf16 %v167, %v166
    %v193 = vpack.c.bf16 %v190, %v189
    %v194 = vpack.c.bf16 %v169, %v168
    %v195 = vld [vmem:[#allocation5] sm:$0xf]
    %v196 = vld [vmem:[#allocation5 + $0x4] sm:$0xf]
    %v197 = vld [vmem:[#allocation5 + $0x8] sm:$0xf]
    %v198 = vld [vmem:[#allocation5 + $0xc] sm:$0xf]
    %v199 = vld [vmem:[#allocation5 + $0x10] sm:$0xf]
    %v200 = vld [vmem:[#allocation5 + $0x14] sm:$0xf]
    %v201 = vld [vmem:[#allocation5 + $0x18] sm:$0xf]
    %v202 = vld [vmem:[#allocation5 + $0x1c] sm:$0xf]
    %v203 = vld [vmem:[#allocation5 + $0x20] sm:$0xf]
    %v204 = vld [vmem:[#allocation5 + $0x24] sm:$0xf]
    %v205 = vld [vmem:[#allocation5 + $0x28] sm:$0xf]
    %v206 = vld [vmem:[#allocation5 + $0x2c] sm:$0xf]
    %v207 = vld [vmem:[#allocation5 + $0x30] sm:$0xf]
    %v208 = vld [vmem:[#allocation5 + $0x34] sm:$0xf]
    %v209 = vld [vmem:[#allocation5 + $0x38] sm:$0xf]
    %v210 = vld [vmem:[#allocation5 + $0x3c] sm:$0xf]
    %v211 = vld [vmem:[#allocation5 + $0x40] sm:$0xf]
    %v212 = vld [vmem:[#allocation5 + $0x44] sm:$0xf]
    %v213 = vld [vmem:[#allocation5 + $0x48] sm:$0xf]
    %v214 = vld [vmem:[#allocation5 + $0x4c] sm:$0xf]
    %v215 = vld [vmem:[#allocation5 + $0x50] sm:$0xf]
    %v216 = vld [vmem:[#allocation5 + $0x54] sm:$0xf]
    %v217 = vld [vmem:[#allocation5 + $0x58] sm:$0xf]
    %v218 = vld [vmem:[#allocation5 + $0x5c] sm:$0xf]
    %v243 = vunpack.c.l.b16 %v195
    %v244 = vunpack.c.l.b16 %v196
    %v245 = vunpack.c.l.b16 %v197
    %v246 = vunpack.c.l.b16 %v198
    %v247 = vunpack.c.l.b16 %v199
    %v248 = vunpack.c.l.b16 %v200
    %v249 = vunpack.c.l.b16 %v201
    %v250 = vunpack.c.l.b16 %v202
    %v251 = vunpack.c.l.b16 %v203
    %v252 = vunpack.c.l.b16 %v204
    %v253 = vunpack.c.l.b16 %v205
    %v254 = vunpack.c.l.b16 %v206
    %v255 = vunpack.c.l.b16 %v207
    %v256 = vunpack.c.l.b16 %v208
    %v257 = vunpack.c.l.b16 %v209
    %v258 = vunpack.c.l.b16 %v210
    %v259 = vunpack.c.l.b16 %v211
    %v260 = vunpack.c.l.b16 %v212
    %v261 = vunpack.c.l.b16 %v213
    %v262 = vunpack.c.l.b16 %v214
    %v263 = vunpack.c.l.b16 %v215
    %v264 = vunpack.c.l.b16 %v216
    %v265 = vunpack.c.l.b16 %v217
    %v266 = vunpack.c.l.b16 %v218
    %v267 = vpack.c.b16 %v244, %v243
    %v268 = vpack.c.b16 %v246, %v245
    %v269 = vpack.c.b16 %v248, %v247
    %v270 = vpack.c.b16 %v250, %v249
    %v271 = vpack.c.b16 %v252, %v251
    %v272 = vpack.c.b16 %v254, %v253
    %v273 = vpack.c.b16 %v256, %v255
    %v274 = vpack.c.b16 %v258, %v257
    %v275 = vpack.c.b16 %v260, %v259
    %v276 = vpack.c.b16 %v262, %v261
    %v277 = vpack.c.b16 %v264, %v263
    %v278 = vpack.c.b16 %v266, %v265
    %v292 = vsel %vm186, %v192, 0
    %v295 = vsel %vm186, %v194, 0
    %297 = vmatprep.subr.bf16.mxu0 0
    %298 = vmatpush1.bf16.msra.mxu0 %v267
    %299 = vmatprep.subr.bf16.mxu0 0
    %300 = vmatpush1.bf16.msra.mxu0 %v268
    %301 = vmatprep.subr.bf16.mxu0 0
    %302 = vmatpush1.bf16.msra.mxu0 %v269
    %303 = vmatprep.subr.bf16.mxu0 0
    %304 = vmatpush1.bf16.msra.mxu0 %v270
    %305 = vmatprep.subr.bf16.mxu0 0
    %306 = vmatpush1.bf16.msra.mxu0 %v271
    %307 = vmatprep.subr.bf16.mxu0 0
    %308 = vmatpush1.bf16.msra.mxu0 %v272
    %309 = vmatprep.subr.bf16.mxu0 0
    %310 = vmatpush1.bf16.msra.mxu0 %v273
    %311 = vmatprep.subr.bf16.mxu0 0
    %312 = vmatpush1.bf16.msra.mxu0 %v274
    %313 = vmatprep.subr.bf16.mxu0 0
    %314 = vmatpush1.bf16.msra.mxu0 %v275
    %315 = vmatprep.subr.bf16.mxu0 0
    %316 = vmatpush1.bf16.msra.mxu0 %v276
    %317 = vmatprep.subr.bf16.mxu0 0
    %318 = vmatpush1.bf16.msra.mxu0 %v277
    %319 = vmatprep.subr.bf16.mxu0 0
    %320 = vmatpush1.bf16.msra.mxu0 %v278
    %321 = vmatprep.subr.bf16.mxu0 0
    %322 = vmatpush1.bf16.msra.mxu0 0
    %323 = vmatprep.subr.bf16.mxu0 0
    %324 = vmatpush1.bf16.msra.mxu0 0
    %325 = vmatprep.subr.bf16.mxu0 0
    %326 = vmatpush1.bf16.msra.mxu0 0
    %327 = vmatprep.subr.bf16.mxu0 0
    %328 = vmatpush1.bf16.msra.mxu0 0
    %329 = vmatprep.mubr.bf16.mxu0 %v292
    %330 = vmatmul.mubr.bf16.gmra.mrb[0].mxu0 %v191
    %v331 = vpop.f32.mrb[0].mxu0
    %v332 = vadd.f32 0.0, %v331
    %v333 = vpop.f32.mrb[0].mxu0
    %v334 = vpop.f32.mrb[0].mxu0
    %v335 = vadd.f32 0.0, %v334
    %v336 = vpop.f32.mrb[0].mxu0
    %337 = vmatprep.mubr.bf16.mxu0 %v295
    %338 = vmatmul.mubr.bf16.gmra.mrb[0].mxu0 %v193
    %v339 = vpop.f32.mrb[0].mxu0
    %v340 = vadd.f32 0.0, %v339
    %v341 = vpop.f32.mrb[0].mxu0
    %v342 = vpop.f32.mrb[0].mxu0
    %v343 = vadd.f32 0.0, %v342
    %v344 = vpop.f32.mrb[0].mxu0
    %345 = vdwg.mxu0
    %v346 = vadd.f32 %v332, %v335
    %v347 = vadd.f32 %v346, %v340
    %v348 = vadd.f32 %v347, %v343
    %v349 = vrot.slane %v348, 4
    %v350 = vadd.f32 %v348, %v349
    %v351 = vrot.slane %v350, 2
    %v352 = vadd.f32 %v350, %v351
    %v353 = vrot.slane %v352, 1
    %v354 = vadd.f32 %v352, %v353
    %355 = vrot.lane.b32.xlu0 %v354, 8
    %v356 = vpop.permute.xlu0 %355
    %v357 = vadd.f32 %v354, %v356
    %358 = vrot.lane.b32.xlu0 %v357, 16
    %v359 = vpop.permute.xlu0 %358
    %v360 = vadd.f32 %v357, %v359
    %361 = vrot.lane.b32.xlu0 %v360, 32
    %v362 = vpop.permute.xlu0 %361
    %v363 = vadd.f32 %v360, %v362
    %364 = vrot.lane.b32.xlu0 %v363, 64
    %v365 = vpop.permute.xlu0 %364
    %v366 = vadd.f32 %v363, %v365
    %v367 = vmul.f32 %v332, %v332
    %v368 = vmul.f32 %v335, %v335
    %v369 = vmul.f32 %v340, %v340
    %v370 = vmul.f32 %v343, %v343
    %v371 = vadd.f32 %v367, %v368
    %v372 = vadd.f32 %v371, %v369
    %v373 = vadd.f32 %v372, %v370
    %v374 = vrot.slane %v373, 4
    %v375 = vadd.f32 %v373, %v374
    %v376 = vrot.slane %v375, 2
    %v377 = vadd.f32 %v375, %v376
    %v378 = vrot.slane %v377, 1
    %v379 = vadd.f32 %v377, %v378
    %380 = vrot.lane.b32.xlu0 %v379, 8
    %v381 = vpop.permute.xlu0 %380
    %v382 = vadd.f32 %v379, %v381
    %383 = vrot.lane.b32.xlu0 %v382, 16
    %v384 = vpop.permute.xlu0 %383
    %v385 = vadd.f32 %v382, %v384
    %386 = vrot.lane.b32.xlu0 %v385, 32
    %v387 = vpop.permute.xlu0 %386
    %v388 = vadd.f32 %v385, %v387
    %389 = vrot.lane.b32.xlu0 %v388, 64
    %v390 = vpop.permute.xlu0 %389
    %v391 = vadd.f32 %v388, %v390
    %v392 = vmul.f32 %v366, 0.001953125
    %v393 = vmul.f32 %v391, 0.001953125
    %v394 = vmul.f32 %v392, %v392
    %v395 = vsub.f32 %v393, %v394
    %v396 = vld [vmem:[%s3] sm:$0x1]
    %v397 = vadd.f32 %v395, 1e-05
    %v398 = vrsqrt.pop %v397
    %v399 = vmul.f32 %v396, %v398
    %v400 = vld [vmem:[%s4] sm:$0x1]
    %v401 = vmul.f32 %v399, %v392
    %v402 = vsub.f32 %v400, %v401
    %v404 = vlaneseq
    %v405 = vshrl.u32 %v404, 7
    %v406 = vsub.s32 0, %v405
    %v407 = vrot.slane %v399, %v406
    %v409 = vmul.f32 %v332, %v407
    %v410 = vmul.f32 %v335, %v407
    %v411 = vmul.f32 %v340, %v407
    %v412 = vmul.f32 %v343, %v407
    %v414 = vlaneseq
    %v415 = vshrl.u32 %v414, 7
    %v416 = vsub.s32 0, %v415
    %v417 = vrot.slane %v402, %v416
    %v419 = vadd.f32 %v409, %v417
    %v420 = vadd.f32 %v410, %v417
    %v421 = vadd.f32 %v411, %v417
    %v422 = vadd.f32 %v412, %v417
    %v423 = vmax.f32 %v419, 0.0
    %v424 = vmax.f32 %v420, 0.0
    %v425 = vmax.f32 %v421, 0.0
    %v426 = vmax.f32 %v422, 0.0
    %v427 = vrot.slane %v423, 7
    %v428 = vrot.slane %v424, 7
    %v429 = vrot.slane %v425, 7
    %v430 = vrot.slane %v426, 7
    %v431 = vsel %vm148, %v429, %v430
    %v432 = vsel %vm148, %v428, %v429
    %v433 = vsel %vm148, %v427, %v428
    %v434 = vsel %vm148, %v430, %v427
    %v435 = vmul.f32 %v434, %v124
    %v436 = vmul.f32 %v433, %v125
    %v437 = vmul.f32 %v432, %v126
    %v438 = vmul.f32 %v431, %v127
    %v439 = vrot.slane %v423, 1
    %v440 = vrot.slane %v424, 1
    %v441 = vrot.slane %v425, 1
    %v442 = vrot.slane %v426, 1
    %v443 = vsel %vm161, %v441, %v442
    %v444 = vsel %vm161, %v440, %v441
    %v445 = vsel %vm161, %v439, %v440
    %v446 = vsel %vm161, %v442, %v439
    %v447 = vmul.f32 %v445, %v136
    %v448 = vmul.f32 %v444, %v137
    %v449 = vmul.f32 %v443, %v138
    %v450 = vmul.f32 %v446, %v139
    %v451 = vpack.c.bf16 %v436, %v435
    %v452 = vpack.c.bf16 %v424, %v423
    %v453 = vpack.c.bf16 %v448, %v447
    %v454 = vpack.c.bf16 %v438, %v437
    %v455 = vpack.c.bf16 %v426, %v425
    %v456 = vpack.c.bf16 %v450, %v449
    %v457 = vld [vmem:[#allocation7] sm:$0xf]
    %v458 = vld [vmem:[#allocation7 + $0x4] sm:$0xf]
    %v459 = vld [vmem:[#allocation7 + $0x8] sm:$0xf]
    %v460 = vld [vmem:[#allocation7 + $0xc] sm:$0xf]
    %v461 = vld [vmem:[#allocation7 + $0x10] sm:$0xf]
    %v462 = vld [vmem:[#allocation7 + $0x14] sm:$0xf]
    %v463 = vld [vmem:[#allocation7 + $0x18] sm:$0xf]
    %v464 = vld [vmem:[#allocation7 + $0x1c] sm:$0xf]
    %v465 = vld [vmem:[#allocation7 + $0x20] sm:$0xf]
    %v466 = vld [vmem:[#allocation7 + $0x24] sm:$0xf]
    %v467 = vld [vmem:[#allocation7 + $0x28] sm:$0xf]
    %v468 = vld [vmem:[#allocation7 + $0x2c] sm:$0xf]
    %v469 = vld [vmem:[#allocation7 + $0x30] sm:$0xf]
    %v470 = vld [vmem:[#allocation7 + $0x34] sm:$0xf]
    %v471 = vld [vmem:[#allocation7 + $0x38] sm:$0xf]
    %v472 = vld [vmem:[#allocation7 + $0x3c] sm:$0xf]
    %v473 = vld [vmem:[#allocation7 + $0x40] sm:$0xf]
    %v474 = vld [vmem:[#allocation7 + $0x44] sm:$0xf]
    %v475 = vld [vmem:[#allocation7 + $0x48] sm:$0xf]
    %v476 = vld [vmem:[#allocation7 + $0x4c] sm:$0xf]
    %v477 = vld [vmem:[#allocation7 + $0x50] sm:$0xf]
    %v478 = vld [vmem:[#allocation7 + $0x54] sm:$0xf]
    %v479 = vld [vmem:[#allocation7 + $0x58] sm:$0xf]
    %v480 = vld [vmem:[#allocation7 + $0x5c] sm:$0xf]
    %v481 = vld [vmem:[#allocation7 + $0x60] sm:$0xf]
    %v482 = vld [vmem:[#allocation7 + $0x64] sm:$0xf]
    %v483 = vld [vmem:[#allocation7 + $0x68] sm:$0xf]
    %v484 = vld [vmem:[#allocation7 + $0x6c] sm:$0xf]
    %v485 = vld [vmem:[#allocation7 + $0x70] sm:$0xf]
    %v486 = vld [vmem:[#allocation7 + $0x74] sm:$0xf]
    %v487 = vld [vmem:[#allocation7 + $0x78] sm:$0xf]
    %v488 = vld [vmem:[#allocation7 + $0x7c] sm:$0xf]
    %v489 = vld [vmem:[#allocation7 + $0x80] sm:$0xf]
    %v490 = vld [vmem:[#allocation7 + $0x84] sm:$0xf]
    %v491 = vld [vmem:[#allocation7 + $0x88] sm:$0xf]
    %v492 = vld [vmem:[#allocation7 + $0x8c] sm:$0xf]
    %v493 = vld [vmem:[#allocation7 + $0x90] sm:$0xf]
    %v494 = vld [vmem:[#allocation7 + $0x94] sm:$0xf]
    %v495 = vld [vmem:[#allocation7 + $0x98] sm:$0xf]
    %v496 = vld [vmem:[#allocation7 + $0x9c] sm:$0xf]
    %v497 = vld [vmem:[#allocation7 + $0xa0] sm:$0xf]
    %v498 = vld [vmem:[#allocation7 + $0xa4] sm:$0xf]
    %v499 = vld [vmem:[#allocation7 + $0xa8] sm:$0xf]
    %v500 = vld [vmem:[#allocation7 + $0xac] sm:$0xf]
    %v501 = vld [vmem:[#allocation7 + $0xb0] sm:$0xf]
    %v502 = vld [vmem:[#allocation7 + $0xb4] sm:$0xf]
    %v503 = vld [vmem:[#allocation7 + $0xb8] sm:$0xf]
    %v504 = vld [vmem:[#allocation7 + $0xbc] sm:$0xf]
    %v553 = vunpack.c.l.b16 %v457
    %v554 = vunpack.c.l.b16 %v458
    %v555 = vunpack.c.l.b16 %v459
    %v556 = vunpack.c.l.b16 %v460
    %v557 = vunpack.c.l.b16 %v461
    %v558 = vunpack.c.l.b16 %v462
    %v559 = vunpack.c.l.b16 %v463
    %v560 = vunpack.c.l.b16 %v464
    %v561 = vunpack.c.l.b16 %v465
    %v562 = vunpack.c.l.b16 %v466
    %v563 = vunpack.c.l.b16 %v467
    %v564 = vunpack.c.l.b16 %v468
    %v565 = vunpack.c.l.b16 %v469
    %v566 = vunpack.c.l.b16 %v470
    %v567 = vunpack.c.l.b16 %v471
    %v568 = vunpack.c.l.b16 %v472
    %v569 = vunpack.c.l.b16 %v473
    %v570 = vunpack.c.l.b16 %v474
    %v571 = vunpack.c.l.b16 %v475
    %v572 = vunpack.c.l.b16 %v476
    %v573 = vunpack.c.l.b16 %v477
    %v574 = vunpack.c.l.b16 %v478
    %v575 = vunpack.c.l.b16 %v479
    %v576 = vunpack.c.l.b16 %v480
    %v577 = vunpack.c.l.b16 %v481
    %v578 = vunpack.c.l.b16 %v482
    %v579 = vunpack.c.l.b16 %v483
    %v580 = vunpack.c.l.b16 %v484
    %v581 = vunpack.c.l.b16 %v485
    %v582 = vunpack.c.l.b16 %v486
    %v583 = vunpack.c.l.b16 %v487
    %v584 = vunpack.c.l.b16 %v488
    %v585 = vunpack.c.l.b16 %v489
    %v586 = vunpack.c.l.b16 %v490
    %v587 = vunpack.c.l.b16 %v491
    %v588 = vunpack.c.l.b16 %v492
    %v589 = vunpack.c.l.b16 %v493
    %v590 = vunpack.c.l.b16 %v494
    %v591 = vunpack.c.l.b16 %v495
    %v592 = vunpack.c.l.b16 %v496
    %v593 = vunpack.c.l.b16 %v497
    %v594 = vunpack.c.l.b16 %v498
    %v595 = vunpack.c.l.b16 %v499
    %v596 = vunpack.c.l.b16 %v500
    %v597 = vunpack.c.l.b16 %v501
    %v598 = vunpack.c.l.b16 %v502
    %v599 = vunpack.c.l.b16 %v503
    %v600 = vunpack.c.l.b16 %v504
    %v601 = vpack.c.b16 %v554, %v553
    %v602 = vpack.c.b16 %v556, %v555
    %v603 = vpack.c.b16 %v558, %v557
    %v604 = vpack.c.b16 %v560, %v559
    %v605 = vpack.c.b16 %v562, %v561
    %v606 = vpack.c.b16 %v564, %v563
    %v607 = vpack.c.b16 %v566, %v565
    %v608 = vpack.c.b16 %v568, %v567
    %v609 = vpack.c.b16 %v570, %v569
    %v610 = vpack.c.b16 %v572, %v571
    %v611 = vpack.c.b16 %v574, %v573
    %v612 = vpack.c.b16 %v576, %v575
    %v613 = vpack.c.b16 %v578, %v577
    %v614 = vpack.c.b16 %v580, %v579
    %v615 = vpack.c.b16 %v582, %v581
    %v616 = vpack.c.b16 %v584, %v583
    %v617 = vpack.c.b16 %v586, %v585
    %v618 = vpack.c.b16 %v588, %v587
    %v619 = vpack.c.b16 %v590, %v589
    %v620 = vpack.c.b16 %v592, %v591
    %v621 = vpack.c.b16 %v594, %v593
    %v622 = vpack.c.b16 %v596, %v595
    %v623 = vpack.c.b16 %v598, %v597
    %v624 = vpack.c.b16 %v600, %v599
    %649 = vmatprep.subr.bf16.mxu0 0
    %650 = vmatpush1.bf16.msra.mxu0 %v601
    %651 = vmatprep.subr.bf16.mxu0 0
    %652 = vmatpush1.bf16.msra.mxu0 %v602
    %653 = vmatprep.subr.bf16.mxu0 0
    %654 = vmatpush1.bf16.msra.mxu0 %v603
    %655 = vmatprep.subr.bf16.mxu0 0
    %656 = vmatpush1.bf16.msra.mxu0 %v604
    %657 = vmatprep.subr.bf16.mxu0 0
    %658 = vmatpush1.bf16.msra.mxu0 %v605
    %659 = vmatprep.subr.bf16.mxu0 0
    %660 = vmatpush1.bf16.msra.mxu0 %v606
    %661 = vmatprep.subr.bf16.mxu0 0
    %662 = vmatpush1.bf16.msra.mxu0 %v607
    %663 = vmatprep.subr.bf16.mxu0 0
    %664 = vmatpush1.bf16.msra.mxu0 %v608
    %665 = vmatprep.subr.bf16.mxu0 0
    %666 = vmatpush1.bf16.msra.mxu0 %v609
    %667 = vmatprep.subr.bf16.mxu0 0
    %668 = vmatpush1.bf16.msra.mxu0 %v610
    %669 = vmatprep.subr.bf16.mxu0 0
    %670 = vmatpush1.bf16.msra.mxu0 %v611
    %671 = vmatprep.subr.bf16.mxu0 0
    %672 = vmatpush1.bf16.msra.mxu0 %v612
    %673 = vmatprep.subr.bf16.mxu0 0
    %674 = vmatpush1.bf16.msra.mxu0 %v613
    %675 = vmatprep.subr.bf16.mxu0 0
    %676 = vmatpush1.bf16.msra.mxu0 %v614
    %677 = vmatprep.subr.bf16.mxu0 0
    %678 = vmatpush1.bf16.msra.mxu0 %v615
    %679 = vmatprep.subr.bf16.mxu0 0
    %680 = vmatpush1.bf16.msra.mxu0 %v616
    %681 = vmatprep.mubr.bf16.mxu0 %v452
    %682 = vmatmul.mubr.bf16.gmra.mrb[0].mxu0 %v451
    %v683 = vpop.f32.mrb[0].mxu0
    %v684 = vadd.f32 0.0, %v683
    %v685 = vpop.f32.mrb[0].mxu0
    %v686 = vpop.f32.mrb[0].mxu0
    %v687 = vadd.f32 0.0, %v686
    %v688 = vpop.f32.mrb[0].mxu0
    %689 = vmatprep.mubr.bf16.mxu0 %v455
    %690 = vmatmul.mubr.bf16.gmra.mrb[0].mxu0 %v454
    %v691 = vpop.f32.mrb[0].mxu0
    %v692 = vadd.f32 0.0, %v691
    %v693 = vpop.f32.mrb[0].mxu0
    %v694 = vpop.f32.mrb[0].mxu0
    %v695 = vadd.f32 0.0, %v694
    %v696 = vpop.f32.mrb[0].mxu0
    %697 = vdwg.mxu0
    %698 = vmatprep.subr.bf16.mxu0 0
    %699 = vmatpush1.bf16.msra.mxu0 %v617
    %700 = vmatprep.subr.bf16.mxu0 0
    %701 = vmatpush1.bf16.msra.mxu0 %v618
    %702 = vmatprep.subr.bf16.mxu0 0
    %703 = vmatpush1.bf16.msra.mxu0 %v619
    %704 = vmatprep.subr.bf16.mxu0 0
    %705 = vmatpush1.bf16.msra.mxu0 %v620
    %706 = vmatprep.subr.bf16.mxu0 0
    %707 = vmatpush1.bf16.msra.mxu0 %v621
    %708 = vmatprep.subr.bf16.mxu0 0
    %709 = vmatpush1.bf16.msra.mxu0 %v622
    %710 = vmatprep.subr.bf16.mxu0 0
    %711 = vmatpush1.bf16.msra.mxu0 %v623
    %712 = vmatprep.subr.bf16.mxu0 0
    %713 = vmatpush1.bf16.msra.mxu0 %v624
    %714 = vmatprep.subr.bf16.mxu0 0
    %715 = vmatpush1.bf16.msra.mxu0 0
    %716 = vmatprep.subr.bf16.mxu0 0
    %717 = vmatpush1.bf16.msra.mxu0 0
    %718 = vmatprep.subr.bf16.mxu0 0
    %719 = vmatpush1.bf16.msra.mxu0 0
    %720 = vmatprep.subr.bf16.mxu0 0
    %721 = vmatpush1.bf16.msra.mxu0 0
    %722 = vmatprep.subr.bf16.mxu0 0
    %723 = vmatpush1.bf16.msra.mxu0 0
    %724 = vmatprep.subr.bf16.mxu0 0
    %725 = vmatpush1.bf16.msra.mxu0 0
    %726 = vmatprep.subr.bf16.mxu0 0
    %727 = vmatpush1.bf16.msra.mxu0 0
    %728 = vmatprep.subr.bf16.mxu0 0
    %729 = vmatpush1.bf16.msra.mxu0 0
    %730 = vmatprep.mubr.bf16.mxu0 0
    %731 = vmatmul.mubr.bf16.gmra.mrb[0].mxu0 %v453
    %v732 = vpop.f32.mrb[0].mxu0
    %v733 = vadd.f32 %v684, %v732
    %v734 = vpop.f32.mrb[0].mxu0
    %v735 = vpop.f32.mrb[0].mxu0
    %v736 = vadd.f32 %v687, %v735
    %v737 = vpop.f32.mrb[0].mxu0
    %738 = vmatprep.mubr.bf16.mxu0 0
    %739 = vmatmul.mubr.bf16.gmra.mrb[0].mxu0 %v456
    %v740 = vpop.f32.mrb[0].mxu0
    %v741 = vadd.f32 %v692, %v740
    %v742 = vpop.f32.mrb[0].mxu0
    %v743 = vpop.f32.mrb[0].mxu0
    %v744 = vadd.f32 %v695, %v743
    %v745 = vpop.f32.mrb[0].mxu0
    %746 = vdwg.mxu0
    %v747 = vadd.f32 %v733, %v736
    %v748 = vadd.f32 %v747, %v741
    %v749 = vadd.f32 %v748, %v744
    %v750 = vrot.slane %v749, 4
    %v751 = vadd.f32 %v749, %v750
    %v752 = vrot.slane %v751, 2
    %v753 = vadd.f32 %v751, %v752
    %v754 = vrot.slane %v753, 1
    %v755 = vadd.f32 %v753, %v754
    %756 = vrot.lane.b32.xlu0 %v755, 8
    %v757 = vpop.permute.xlu0 %756
    %v758 = vadd.f32 %v755, %v757
    %759 = vrot.lane.b32.xlu0 %v758, 16
    %v760 = vpop.permute.xlu0 %759
    %v761 = vadd.f32 %v758, %v760
    %762 = vrot.lane.b32.xlu0 %v761, 32
    %v763 = vpop.permute.xlu0 %762
    %v764 = vadd.f32 %v761, %v763
    %765 = vrot.lane.b32.xlu0 %v764, 64
    %v766 = vpop.permute.xlu0 %765
    %v767 = vadd.f32 %v764, %v766
    %v768 = vmul.f32 %v733, %v733
    %v769 = vmul.f32 %v736, %v736
    %v770 = vmul.f32 %v741, %v741
    %v771 = vmul.f32 %v744, %v744
    %v772 = vadd.f32 %v768, %v769
    %v773 = vadd.f32 %v772, %v770
    %v774 = vadd.f32 %v773, %v771
    %v775 = vrot.slane %v774, 4
    %v776 = vadd.f32 %v774, %v775
    %v777 = vrot.slane %v776, 2
    %v778 = vadd.f32 %v776, %v777
    %v779 = vrot.slane %v778, 1
    %v780 = vadd.f32 %v778, %v779
    %781 = vrot.lane.b32.xlu0 %v780, 8
    %v782 = vpop.permute.xlu0 %781
    %v783 = vadd.f32 %v780, %v782
    %784 = vrot.lane.b32.xlu0 %v783, 16
    %v785 = vpop.permute.xlu0 %784
    %v786 = vadd.f32 %v783, %v785
    %787 = vrot.lane.b32.xlu0 %v786, 32
    %v788 = vpop.permute.xlu0 %787
    %v789 = vadd.f32 %v786, %v788
    %790 = vrot.lane.b32.xlu0 %v789, 64
    %v791 = vpop.permute.xlu0 %790
    %v792 = vadd.f32 %v789, %v791
    %v793 = vmul.f32 %v767, 0.001953125
    %v794 = vmul.f32 %v792, 0.001953125
    %v795 = vmul.f32 %v793, %v793
    %v796 = vsub.f32 %v794, %v795
    %v797 = vadd.f32 %v796, 1e-05
    %v798 = vrsqrt.pop %v797
    %v799 = vmul.f32 %v396, %v798
    %v800 = vmul.f32 %v799, %v793
    %v801 = vsub.f32 %v400, %v800
    %v803 = vlaneseq
    %v804 = vshrl.u32 %v803, 7
    %v805 = vsub.s32 0, %v804
    %v806 = vrot.slane %v799, %v805
    %v808 = vmul.f32 %v733, %v806
    %v809 = vmul.f32 %v736, %v806
    %v810 = vmul.f32 %v741, %v806
    %v811 = vmul.f32 %v744, %v806
    %v813 = vlaneseq
    %v814 = vshrl.u32 %v813, 7
    %v815 = vsub.s32 0, %v814
    %v816 = vrot.slane %v801, %v815
    %v818 = vadd.f32 %v808, %v816
    %v819 = vadd.f32 %v809, %v816
    %v820 = vadd.f32 %v810, %v816
    %v821 = vadd.f32 %v811, %v816
    %v822 = vmax.f32 %v818, 0.0
    %v823 = vmax.f32 %v819, 0.0
    %v824 = vmax.f32 %v820, 0.0
    %v825 = vmax.f32 %v821, 0.0
    %826 = vst [vmem:[#allocation8] sm:$0xff] %v822
    %827 = vst [vmem:[#allocation8 + $0x8] sm:$0xff] %v823
    %828 = vst [vmem:[#allocation8 + $0x10] sm:$0xff] %v824
    %829 = vst [vmem:[#allocation8 + $0x18] sm:$0xff] %v825
    // Predicated region
    $region34: #{tpu_custom_call.1} parent=1 // pred_check
      _
    $region35: #{tpu_custom_call.1} parent=1 // pred_check_branch
      %831 = sbr.rel (0) target = $region37
    $region36: #{tpu_custom_call.1} parent=1 // pred_region
      %s833 = ssub.s32 512, 512
      %834 = vsyncadd [#allocation4], %s833
      %s835 = sshll.u32 [#allocation8], 4
      %s836 = int_to_ptr.vmem [resolvable:$true] %s835
      %841 = dma.vmem_to_hbm [thread:$0]  %s836, 512, %s5, [#allocation4], 128, 128, 8
    $region37: #{tpu_custom_call.1} parent=1 // pred_fallthru
      _
    // Predicated region
    $region38: #{tpu_custom_call.1} parent=1 // pred_check
      _
    $region39: #{tpu_custom_call.1} parent=1 // pred_check_branch
      %843 = sbr.rel (0) target = $region41
    $region40: #{tpu_custom_call.1} parent=1 // pred_region
      %844 = dma.done [#allocation4], 512
    $region41: #{tpu_custom_call.1} parent=1 // pred_fallthru
      _
    %845 = vsyncpa [#allocation3], 1
    %846 = vsyncpa [#allocation6], 1
    %847 = vsyncpa [#allocation4], 1

</llo_original>
